<compile_context>
chip_gen: v6e
topology: v6e:2x2x1
jax: 0.10.0
libtpu: 0.0.40
codegen_flags: <defaults>
</compile_context>

<pallas_src>
import functools

import jax
import jax.numpy as jnp
from jax.experimental import pallas as pl
from jax.experimental.pallas import tpu as pltpu


def _round_up(v: int, m: int) -> int:
    return (v + m - 1) // m * m


def _cdiv(a: int, b: int) -> int:
    return (a + b - 1) // b


def _spec(shape, index_map, buffer_count=None):
    """BlockSpec helper; optionally requests N-deep buffering (falls back cleanly)."""
    if buffer_count is not None and hasattr(pl, "Buffered"):
        try:
            return pl.BlockSpec(shape, index_map, pipeline_mode=pl.Buffered(buffer_count))
        except TypeError:  # pipeline_mode kwarg unavailable in this jax version
            pass
    return pl.BlockSpec(shape, index_map)


def _classifier_head_kernel(x_ref, w_ref, b_ref, o_ref, acc_ref, *,
                            c, hw, tile_hw, inv_hw):
    # x_ref:   [TN, C, THW]      x streamed straight from NCHW (HW on the lane axis)
    # w_ref:   [C_pad, NC_TILE]  (resident / streamed per class tile)
    # b_ref:   [1, NC_TILE]
    # o_ref:   [TN, NC_TILE]
    # acc_ref: [TN, C_pad] f32   pooled-sum accumulator (persists across NC / HW axes)
    j = pl.program_id(1)              # num_classes tile
    k = pl.program_id(2)              # HW (reduction) tile
    nk = pl.num_programs(2)

    @pl.when(jnp.logical_and(j == 0, k == 0))
    def _init():
        acc_ref[...] = jnp.zeros_like(acc_ref)

    # Pool only on the first class tile; the accumulator is reused for every class tile.
    @pl.when(j == 0)
    def _pool():
        x = x_ref[...]
        if hw % tile_hw != 0:
            # Ragged last HW chunk: mask out-of-range lanes instead of padding x in HBM.
            lane = jax.lax.broadcasted_iota(jnp.int32, x.shape, 2)
            x = jnp.where(lane < (hw - k * tile_hw), x, jnp.zeros_like(x))
        # Sublane/lane-axis sum with f32 accumulation; hidden under the x DMA.
        acc_ref[:, :c] += jnp.sum(x, axis=2, dtype=jnp.float32)

    @pl.when(k == nk - 1)
    def _finalize():
        pooled = acc_ref[...] * inv_hw                       # divide by TRUE HW
        w = w_ref[...]
        y = jnp.dot(pooled.astype(w.dtype), w, preferred_element_type=jnp.float32)
        o_ref[...] = (y + b_ref[...].astype(jnp.float32)).astype(o_ref.dtype)


def classifier_head(x_nchw, weight, bias):
    """ClassifierHead forward.

    x_nchw: [N, C, H, W]; weight: [num_classes, C] (PyTorch layout); bias: [num_classes].
    Returns [N, num_classes].
    """
    N, C, H, W = x_nchw.shape
    HW = H * W
    num_classes = weight.shape[0]

    # Metadata-only reshape: no transpose, no pad, no extra HBM pass over x.
    x = x_nchw.reshape(N, C, HW)
    x_itemsize = jnp.dtype(x.dtype).itemsize
    w_itemsize = jnp.dtype(weight.dtype).itemsize

    # ---- per-generation VMEM budgets ----------------------------------------
    try:
        vmem_cap = int(pltpu.get_tpu_info().vmem_capacity_bytes)
    except Exception:
        vmem_cap = 64 << 20                              # conservative (v7x)
    small_vmem = vmem_cap <= (96 << 20)                  # v7x: 64 MiB ; v5e/v6e: 128 MiB
    x_budget = (6 << 20) if small_vmem else (16 << 20)   # per x buffer (double-buffered)
    w_budget = (6 << 20) if small_vmem else (8 << 20)    # per resident weight tile

    # ---- batch tile ----------------------------------------------------------
    TILE_N = min(_round_up(max(N, 1), 8), 128)
    if _cdiv(N, TILE_N) < 2 and TILE_N > 8:
        # Give both v7x TensorCores a batch block when N allows it.
        TILE_N = max(8, _round_up(_cdiv(N, 2), 8))
    # Shrink TILE_N (instead of flooring TILE_HW past the budget) so a minimal
    # 128-lane HW chunk always fits the per-buffer budget.
    min_hw_chunk = min(HW, 128)
    max_tn = max(8, (x_budget // max(1, C * min_hw_chunk * x_itemsize)) // 8 * 8)
    TILE_N = min(TILE_N, max_tn)

    # ---- HW (reduction) tile -------------------------------------------------
    max_hw = x_budget // max(1, TILE_N * C * x_itemsize)
    if HW <= max_hw:
        TILE_HW = HW                                     # single block, no mask needed
    else:
        TILE_HW = max(128, (max_hw // 128) * 128)        # ragged tail masked in-kernel
    hw_blocks = _cdiv(HW, TILE_HW)

    # ---- channel / class padding (weight & accumulator only; x untouched) ----
    C_pad = _round_up(C, 128)
    max_nc = max(128, (w_budget // max(1, C_pad * w_itemsize)) // 128 * 128)
    NC_TILE = min(_round_up(num_classes, 128), max_nc)
    NC_pad = _round_up(num_classes, NC_TILE)
    nc_blocks = NC_pad // NC_TILE

    # Weight/bias are tiny next to x: transposing + zero-padding them is cheap & exact.
    w_p = jnp.pad(weight.T, ((0, C_pad - C), (0, NC_pad - num_classes)))
    b_p = jnp.pad(bias, (0, NC_pad - num_classes)).reshape(1, NC_pad)

    # ---- index maps ----------------------------------------------------------
    if nc_blocks > 1:
        # For j > 0 the pooled sums already live in the accumulator, so pin x to a
        # constant block: consecutive equal block indices skip the redundant DMA.
        x_map = lambda i, j, k: (i, 0, jnp.where(j == 0, k, 0))
    else:
        x_map = lambda i, j, k: (i, 0, k)
    w_map = lambda i, j, k: (0, j)
    b_map = lambda i, j, k: (0, j)
    o_map = lambda i, j, k: (i, j)

    # ---- VMEM accounting / compiler limit ------------------------------------
    x_blk = TILE_N * C * TILE_HW * x_itemsize
    w_blk = C_pad * NC_TILE * w_itemsize
    o_blk = TILE_N * NC_TILE * x_itemsize
    acc_blk = TILE_N * C_pad * 4
    # Single-buffer resident weight/bias (constant index_map): the 2nd pipeline buffer
    # is never used. Only bother when it actually saves meaningful VMEM.
    wb_bufs = 1 if (nc_blocks == 1 and w_blk >= (1 << 20)) else None
    n_w_bufs = 1 if wb_bufs == 1 else 2
    need = (2 * x_blk + n_w_bufs * w_blk + 2 * (NC_TILE * w_itemsize)
            + 2 * o_blk + acc_blk)
    vmem_limit = min(max(need + (4 << 20), 32 << 20), (vmem_cap * 3) // 4)
    vmem_limit = max(vmem_limit, need + (2 << 20))

    grid = (_cdiv(N, TILE_N), nc_blocks, hw_blocks)
    kernel = functools.partial(_classifier_head_kernel,
                               c=C, hw=HW, tile_hw=TILE_HW, inv_hw=1.0 / float(HW))

    out = pl.pallas_call(
        kernel,
        out_shape=jax.ShapeDtypeStruct((N, NC_pad), x.dtype),
        grid_spec=pltpu.PrefetchScalarGridSpec(
            num_scalar_prefetch=0,
            grid=grid,
            in_specs=[
                _spec((TILE_N, C, TILE_HW), x_map),
                _spec((C_pad, NC_TILE), w_map, wb_bufs),
                _spec((1, NC_TILE), b_map, wb_bufs),
            ],
            out_specs=_spec((TILE_N, NC_TILE), o_map),
            scratch_shapes=[pltpu.VMEM((TILE_N, C_pad), jnp.float32)],
        ),
        compiler_params=pltpu.CompilerParams(
            dimension_semantics=("parallel", "arbitrary", "arbitrary"),
            vmem_limit_bytes=int(vmem_limit),
        ),
    )(x, w_p, b_p)

    # TODO(synk): num_classes <= 0 (Identity fc) and non-'avg' pool types are not handled;
    # the module under test is instantiated with pool_type='avg', use_conv=False, drop=0.
    return out[:, :num_classes]


def _reference(x_nchw, weight, bias):
    pooled = jnp.mean(x_nchw, axis=(2, 3))        # [N, C]
    return pooled @ weight.T + bias               # [N, num_classes]


if __name__ == "__main__":
    key = jax.random.PRNGKey(0)
    k_x, k_w, k_b = jax.random.split(key, 3)

    # Small shapes consistent with the module: batch=2, in_chs=4, spatial=16x16, classes=10
    N, C, H, W = 2, 4, 16, 16
    num_classes = 10

    x = jax.random.normal(k_x, (N, C, H, W), dtype=jnp.float32)

    bound = 1.0 / (C ** 0.5)
    weight = jax.random.uniform(k_w, (num_classes, C), minval=-bound, maxval=bound,
                                dtype=jnp.float32)
    bias = jax.random.uniform(k_b, (num_classes,), minval=-bound, maxval=bound,
                              dtype=jnp.float32)

    out = classifier_head(x, weight, bias)
    out = jax.block_until_ready(out)

    ref = _reference(x, weight, bias)
    assert out.shape == (N, num_classes)
    assert jnp.allclose(out, ref, atol=1e-5, rtol=1e-5), "mismatch vs reference"

    print("KERNEL_OK")
</pallas_src>

<mosaic_0001>
module attributes {stable_mosaic.version = 11 : i64} {
  func.func @_classifier_head_kernel(%arg0: i32, %arg1: i32, %arg2: i32, %arg3: memref<8x4x256xf32, #tpu.memory_space<vmem>>, %arg4: memref<128x128xf32, #tpu.memory_space<vmem>>, %arg5: memref<1x128xf32, #tpu.memory_space<vmem>>, %arg6: memref<8x128xf32, #tpu.memory_space<vmem>>, %arg7: memref<8x128xf32, #tpu.memory_space<vmem>>) attributes {dimension_semantics = [#tpu.dimension_semantics<parallel>, #tpu.dimension_semantics<arbitrary>, #tpu.dimension_semantics<arbitrary>], iteration_bounds = array<i64: 1, 1, 1>, scalar_prefetch = 0 : i64, scratch_operands = 1 : i64, tpu.core_type = #tpu.core_type<tc>, window_params = [{transform_indices = @transform_0, window_bounds = array<i64: 8, 4, 256>}, {transform_indices = @transform_1, window_bounds = array<i64: 128, 128>}, {transform_indices = @transform_2, window_bounds = array<i64: 1, 128>}, {transform_indices = @transform_3, window_bounds = array<i64: 8, 128>}]} {
    %c0_i32 = arith.constant 0 : i32
    %0 = arith.cmpi eq, %arg1, %c0_i32 : i32
    %c0_i32_0 = arith.constant 0 : i32
    %1 = arith.cmpi eq, %arg2, %c0_i32_0 : i32
    %2 = arith.andi %0, %1 : i1
    %3 = arith.extui %2 : i1 to i32
    %c0_i32_1 = arith.constant 0 : i32
    %4 = arith.cmpi ne, %3, %c0_i32_1 : i32
    scf.if %4 {
      %cst = arith.constant 0.000000e+00 : f32
      %11 = vector.broadcast %cst : f32 to vector<8x128xf32>
      %c0 = arith.constant 0 : index
      %c0_6 = arith.constant 0 : index
      %12 = vector.load %arg7[%c0, %c0_6] : memref<8x128xf32, #tpu.memory_space<vmem>>, vector<8x128xf32>
      tpu.vector_store %arg7[%c0, %c0_6], %11 {strides = array<i32>} : memref<8x128xf32, #tpu.memory_space<vmem>>, vector<8x128xf32>,
    } else {
    }
    %c0_i32_2 = arith.constant 0 : i32
    %5 = arith.cmpi eq, %arg1, %c0_i32_2 : i32
    %6 = arith.extui %5 : i1 to i32
    %c0_i32_3 = arith.constant 0 : i32
    %7 = arith.cmpi ne, %6, %c0_i32_3 : i32
    scf.if %7 {
      %c0 = arith.constant 0 : index
      %c0_6 = arith.constant 0 : index
      %c0_7 = arith.constant 0 : index
      %11 = vector.load %arg3[%c0, %c0_6, %c0_7] : memref<8x4x256xf32, #tpu.memory_space<vmem>>, vector<8x4x256xf32>
      %c0_8 = arith.constant 0 : index
      %c0_9 = arith.constant 0 : index
      %12 = vector.load %arg7[%c0_8, %c0_9] : memref<8x128xf32, #tpu.memory_space<vmem>>, vector<8x4xf32>
      %cst = arith.constant dense<0.000000e+00> : vector<8x4xf32>
      %13 = vector.multi_reduction <add>, %11, %cst [2] : vector<8x4x256xf32> to vector<8x4xf32>
      %14 = arith.addf %12, %13 : vector<8x4xf32>
      %c0_10 = arith.constant 0 : index
      %c0_11 = arith.constant 0 : index
      %15 = vector.load %arg7[%c0_10, %c0_11] : memref<8x128xf32, #tpu.memory_space<vmem>>, vector<8x4xf32>
      tpu.vector_store %arg7[%c0_10, %c0_11], %14 {strides = array<i32>} : memref<8x128xf32, #tpu.memory_space<vmem>>, vector<8x4xf32>,
    } else {
    }
    %c0_i32_4 = arith.constant 0 : i32
    %8 = arith.cmpi eq, %arg2, %c0_i32_4 : i32
    %9 = arith.extui %8 : i1 to i32
    %c0_i32_5 = arith.constant 0 : i32
    %10 = arith.cmpi ne, %9, %c0_i32_5 : i32
    scf.if %10 {
      %c0 = arith.constant 0 : index
      %c0_6 = arith.constant 0 : index
      %11 = vector.load %arg7[%c0, %c0_6] : memref<8x128xf32, #tpu.memory_space<vmem>>, vector<8x128xf32>
      %cst = arith.constant 3.906250e-03 : f32
      %12 = vector.broadcast %cst : f32 to vector<8x128xf32>
      %13 = arith.mulf %11, %12 : vector<8x128xf32>
      %c0_7 = arith.constant 0 : index
      %c0_8 = arith.constant 0 : index
      %14 = vector.load %arg4[%c0_7, %c0_8] : memref<128x128xf32, #tpu.memory_space<vmem>>, vector<128x128xf32>
      %cst_9 = arith.constant dense<0.000000e+00> : vector<8x128xf32>
      %15 = tpu.matmul %13, %14, %cst_9 {dimension_numbers = #tpu.dot_dimension_numbers<[1], [0], [0], [1], [0, 0, 1, 1], [], []>} : vector<8x128xf32>, vector<128x128xf32>, vector<8x128xf32> -> vector<8x128xf32>
      %c0_10 = arith.constant 0 : index
      %c0_11 = arith.constant 0 : index
      %16 = vector.load %arg5[%c0_10, %c0_11] : memref<1x128xf32, #tpu.memory_space<vmem>>, vector<1x128xf32>
      %17 = vector.broadcast %16 : vector<1x128xf32> to vector<8x128xf32>
      %18 = arith.addf %15, %17 : vector<8x128xf32>
      %c0_12 = arith.constant 0 : index
      %c0_13 = arith.constant 0 : index
      %19 = vector.load %arg6[%c0_12, %c0_13] : memref<8x128xf32, #tpu.memory_space<vmem>>, vector<8x128xf32>
      tpu.vector_store %arg6[%c0_12, %c0_13], %18 {strides = array<i32>} : memref<8x128xf32, #tpu.memory_space<vmem>>, vector<8x128xf32>,
    } else {
    }
    return
  }
  func.func @transform_0(%arg0: i32, %arg1: i32, %arg2: i32) -> (i32, i32, i32) {
    %c0_i32 = arith.constant 0 : i32
    %c0_i32_0 = arith.constant 0 : i32
    return %arg0, %c0_i32, %arg2 : i32, i32, i32
  }
  func.func @transform_1(%arg0: i32, %arg1: i32, %arg2: i32) -> (i32, i32) {
    %c0_i32 = arith.constant 0 : i32
    %c0_i32_0 = arith.constant 0 : i32
    return %c0_i32, %arg1 : i32, i32
  }
  func.func @transform_2(%arg0: i32, %arg1: i32, %arg2: i32) -> (i32, i32) {
    %c0_i32 = arith.constant 0 : i32
    %c0_i32_0 = arith.constant 0 : i32
    return %c0_i32, %arg1 : i32, i32
  }
  func.func @transform_3(%arg0: i32, %arg1: i32, %arg2: i32) -> (i32, i32) {
    %c0_i32 = arith.constant 0 : i32
    return %arg0, %arg1 : i32, i32
  }
}

</mosaic_0001>

<llo_original>
// kernel: tpu_custom_call.1
$region0: #{tpu_custom_call.1}
  #allocation0 [shape = 'u32[]', space=smem, size = 0x4, offset = 0x4, fixed_abs, tag = 'smem constant byte address 0x4 - core index']
  #allocation1 [shape = 'u32[144,128]{1,0:T(1,128)}', space=vmem, size = 0x12000, scoped, tag = 'internal scratch']
  #allocation2 [shape = 'f32[8,128]{1,0:T(8,128)}', space=vmem, size = 0x1000, scoped, tag = 'scratch operand']
  %s0 = inlined_call_operand.hbm [shape: f32[2,4,256], index: 0, kind: input, shape index: {}]
  %s1 = inlined_call_operand.hbm [shape: f32[128,128], index: 1, kind: input, shape index: {}]
  %s2 = inlined_call_operand.vmem [shape: f32[1,128], index: 2, kind: input, shape index: {}]
  %s3 = inlined_call_operand.hbm [shape: f32[2,128], index: 3, kind: output, shape index: {}]
  %s4 = sld [smem:[#allocation0]]
  $region42: #{tpu_custom_call.1} parent=0
    _
  %s6 = ssub.s32 1, %s4
  %s7 = scalar_select 0, %s6, %s4
  $region1: #{tpu_custom_call.1} parent=0
    #allocation3 [shape = 'u8[32768]{0}', space=vmem, size = 0x8000, scoped, tag = 'input window, operand 0, single buffered']
    #allocation4 [shape = 's32[1]{0}', space=sflag, size = 0x4, scoped, tag = 'scoped memory for tpu_custom_call.1']
    #allocation5 [shape = 's32[1]{0}', space=sflag, size = 0x4, scoped, tag = 'scoped memory for tpu_custom_call.1']
    #allocation6 [shape = 'u8[65536]{0}', space=vmem, size = 0x10000, scoped, tag = 'input window, operand 1, single buffered']
    #allocation7 [shape = 's32[1]{0}', space=sflag, size = 0x4, scoped, tag = 'scoped memory for tpu_custom_call.1']
    #allocation8 [shape = 'u8[4096]{0}', space=vmem, size = 0x1000, scoped, tag = 'output window, operand 0, single buffered']
    %8 = vsyncpa [#allocation4], 0
    %9 = vsyncpa [#allocation7], 0
    %10 = vsyncpa [#allocation5], 0
    // Predicated region
    $region2: #{tpu_custom_call.1} parent=1 // pred_check
      _
    $region3: #{tpu_custom_call.1} parent=1 // pred_check_branch
      %12 = sbr.rel (0) target = $region5
    $region4: #{tpu_custom_call.1} parent=1 // pred_region
      %s14 = ssub.s32 1024, 256
      %15 = vsyncadd [#allocation4], %s14
      %s16 = sshll.u32 [#allocation3], 4
      %s17 = int_to_ptr.vmem [resolvable:$true] %s16
      %22 = dma.hbm_to_vmem [thread:$0]  %s0, 256, %s17, [#allocation4], 128, 128, 8
    $region5: #{tpu_custom_call.1} parent=1 // pred_fallthru
      _
    // Predicated region
    $region6: #{tpu_custom_call.1} parent=1 // pred_check
      _
    $region7: #{tpu_custom_call.1} parent=1 // pred_check_branch
      %24 = sbr.rel (0) target = $region9
    $region8: #{tpu_custom_call.1} parent=1 // pred_region
      %s26 = ssub.s32 2048, 2048
      %27 = vsyncadd [#allocation7], %s26
      %s28 = sshll.u32 [#allocation6], 4
      %s29 = int_to_ptr.vmem [resolvable:$true] %s28
      %34 = dma.hbm_to_vmem [thread:$0]  %s1, 2048, %s29, [#allocation7], 128, 128, 8
    $region9: #{tpu_custom_call.1} parent=1 // pred_fallthru
      _
    // Predicated region
    $region10: #{tpu_custom_call.1} parent=1 // pred_check
      _
    $region11: #{tpu_custom_call.1} parent=1 // pred_check_branch
      %36 = sbr.rel (0) target = $region13
    $region12: #{tpu_custom_call.1} parent=1 // pred_region
      _
    $region13: #{tpu_custom_call.1} parent=1 // pred_fallthru
      _
    // Predicated region
    $region14: #{tpu_custom_call.1} parent=1 // pred_check
      _
    $region15: #{tpu_custom_call.1} parent=1 // pred_check_branch
      %38 = sbr.rel (0) target = $region17
    $region16: #{tpu_custom_call.1} parent=1 // pred_region
      %39 = dma.done [#allocation4], 1024
    $region17: #{tpu_custom_call.1} parent=1 // pred_fallthru
      _
    // Predicated region
    $region18: #{tpu_custom_call.1} parent=1 // pred_check
      _
    $region19: #{tpu_custom_call.1} parent=1 // pred_check_branch
      %41 = sbr.rel (0) target = $region21
    $region20: #{tpu_custom_call.1} parent=1 // pred_region
      %42 = dma.done [#allocation7], 2048
    $region21: #{tpu_custom_call.1} parent=1 // pred_fallthru
      _
    %p43 = scmp.eq.s32.totalorder 0, 0
    %p44 = scmp.eq.s32.totalorder 0, 0
    %p45 = pnand %p43, %p44
    %p46 = pneg %p45
    // Predicated region
    $region22: #{tpu_custom_call.1} parent=1 // pred_check
      _
    $region23: #{tpu_custom_call.1} parent=1 // pred_check_branch
      %48 = sbr.rel (%p45) target = $region25
    $region24: #{tpu_custom_call.1} parent=1 // pred_region
      %49 = vst [vmem:[#allocation2] sm:$0xff] 0.0
    $region25: #{tpu_custom_call.1} parent=1 // pred_fallthru
      _
    // Predicated region
    $region26: #{tpu_custom_call.1} parent=1 // pred_check
      %p50 = pneg %p43
    $region27: #{tpu_custom_call.1} parent=1 // pred_check_branch
      %52 = sbr.rel (%p50) target = $region29
    $region28: #{tpu_custom_call.1} parent=1 // pred_region
      %v53 = vld [vmem:[#allocation3] sm:$0xff]
      %v54 = vld [vmem:[#allocation3 + $0x8] sm:$0xff]
      %v55 = vld [vmem:[#allocation3 + $0x10] sm:$0xff]
      %v56 = vld [vmem:[#allocation3 + $0x18] sm:$0xff]
      %v57 = vld [vmem:[#allocation3 + $0x20] sm:$0xff]
      %v58 = vld [vmem:[#allocation3 + $0x28] sm:$0xff]
      %v59 = vld [vmem:[#allocation3 + $0x30] sm:$0xff]
      %v60 = vld [vmem:[#allocation3 + $0x38] sm:$0xff]
      %v61 = vld [vmem:[#allocation2] sm:$0xff]
      %v70 = vcombine.high %v53, %v53
      %v71 = vcombine.high %v54, %v54
      %v72 = vcombine.high %v55, %v55
      %v73 = vcombine.high %v56, %v56
      %v74 = vcombine.high %v57, %v57
      %v75 = vcombine.high %v58, %v58
      %v76 = vcombine.high %v59, %v59
      %v77 = vcombine.high %v60, %v60
      %vm86 = vcmask 1043456
      %v87 = vsel %vm86, %v53, 0.0
      %v88 = vsel %vm86, %v70, 0.0
      %v89 = vadd.f32 %v87, %v88
      %90 = vadd.xlane.f32.xlu0 %v89
      %v91 = vpop.xlane.xlu0 %90
      %v92 = vsel %vm86, %v54, 0.0
      %v93 = vsel %vm86, %v71, 0.0
      %v94 = vadd.f32 %v92, %v93
      %95 = vadd.xlane.f32.xlu0 %v94
      %v96 = vpop.xlane.xlu0 %95
      %v97 = vsel %vm86, %v55, 0.0
      %v98 = vsel %vm86, %v72, 0.0
      %v99 = vadd.f32 %v97, %v98
      %100 = vadd.xlane.f32.xlu0 %v99
      %v101 = vpop.xlane.xlu0 %100
      %v102 = vsel %vm86, %v56, 0.0
      %v103 = vsel %vm86, %v73, 0.0
      %v104 = vadd.f32 %v102, %v103
      %105 = vadd.xlane.f32.xlu0 %v104
      %v106 = vpop.xlane.xlu0 %105
      %v107 = vsel %vm86, %v57, 0.0
      %v108 = vsel %vm86, %v74, 0.0
      %v109 = vadd.f32 %v107, %v108
      %110 = vadd.xlane.f32.xlu0 %v109
      %v111 = vpop.xlane.xlu0 %110
      %v112 = vsel %vm86, %v58, 0.0
      %v113 = vsel %vm86, %v75, 0.0
      %v114 = vadd.f32 %v112, %v113
      %115 = vadd.xlane.f32.xlu0 %v114
      %v116 = vpop.xlane.xlu0 %115
      %v117 = vsel %vm86, %v59, 0.0
      %v118 = vsel %vm86, %v76, 0.0
      %v119 = vadd.f32 %v117, %v118
      %120 = vadd.xlane.f32.xlu0 %v119
      %v121 = vpop.xlane.xlu0 %120
      %v122 = vsel %vm86, %v60, 0.0
      %v123 = vsel %vm86, %v77, 0.0
      %v124 = vadd.f32 %v122, %v123
      %125 = vadd.xlane.f32.xlu0 %v124
      %v126 = vpop.xlane.xlu0 %125
      %v135 = vlaneseq
      %v136 = vand.u32 %v135, 127
      %v137 = vlaneseq
      %v138 = vshrl.u32 %v137, 7
      %v139 = vsub.s32 %v136, %v138
      %v140 = vrot.slane %v91, %v139
      %v141 = vlaneseq
      %v142 = vshrl.u32 %v141, 7
      %v143 = vsub.s32 %v136, %v142
      %v144 = vrot.slane %v96, %v143
      %v145 = vlaneseq
      %v146 = vshrl.u32 %v145, 7
      %v147 = vsub.s32 %v136, %v146
      %v148 = vrot.slane %v101, %v147
      %v149 = vlaneseq
      %v150 = vshrl.u32 %v149, 7
      %v151 = vsub.s32 %v136, %v150
      %v152 = vrot.slane %v106, %v151
      %v153 = vlaneseq
      %v154 = vshrl.u32 %v153, 7
      %v155 = vsub.s32 %v136, %v154
      %v156 = vrot.slane %v111, %v155
      %v157 = vlaneseq
      %v158 = vshrl.u32 %v157, 7
      %v159 = vsub.s32 %v136, %v158
      %v160 = vrot.slane %v116, %v159
      %v161 = vlaneseq
      %v162 = vshrl.u32 %v161, 7
      %v163 = vsub.s32 %v136, %v162
      %v164 = vrot.slane %v121, %v163
      %v165 = vlaneseq
      %v166 = vshrl.u32 %v165, 7
      %v167 = vsub.s32 %v136, %v166
      %v168 = vrot.slane %v126, %v167
      %vm169 = vcmask 1041409
      %v170 = vsel %vm169, %v144, %v140
      %vm171 = vcmask 1042434
      %v172 = vsel %vm171, %v148, %v170
      %vm173 = vcmask 1043459
      %v174 = vsel %vm173, %v152, %v172
      %vm175 = vcmask 1044484
      %v176 = vsel %vm175, %v156, %v174
      %vm177 = vcmask 1045509
      %v178 = vsel %vm177, %v160, %v176
      %vm179 = vcmask 1046534
      %v180 = vsel %vm179, %v164, %v178
      %vm181 = vcmask 1047559
      %v182 = vsel %vm181, %v168, %v180
      %v184 = vadd.f32 %v61, %v182
      %vm185 = vcmask 31744
      %186 = vst.msk [vmem:[#allocation2] sm:$0xff] %vm185, %v184
    $region29: #{tpu_custom_call.1} parent=1 // pred_fallthru
      _
    // Predicated region
    $region30: #{tpu_custom_call.1} parent=1 // pred_check
      %p187 = pneg %p44
    $region31: #{tpu_custom_call.1} parent=1 // pred_check_branch
      %189 = sbr.rel (%p187) target = $region33
    $region32: #{tpu_custom_call.1} parent=1 // pred_region
      %v190 = vld [vmem:[#allocation2] sm:$0xff]
      %v191 = vmul.f32 %v190, 0.00390625
      %v192 = vld [vmem:[#allocation6] sm:$0xff]
      %v193 = vld [vmem:[#allocation6 + $0x8] sm:$0xff]
      %v194 = vld [vmem:[#allocation6 + $0x10] sm:$0xff]
      %v195 = vld [vmem:[#allocation6 + $0x18] sm:$0xff]
      %v196 = vld [vmem:[#allocation6 + $0x20] sm:$0xff]
      %v197 = vld [vmem:[#allocation6 + $0x28] sm:$0xff]
      %v198 = vld [vmem:[#allocation6 + $0x30] sm:$0xff]
      %v199 = vld [vmem:[#allocation6 + $0x38] sm:$0xff]
      %v200 = vld [vmem:[#allocation6 + $0x40] sm:$0xff]
      %v201 = vld [vmem:[#allocation6 + $0x48] sm:$0xff]
      %v202 = vld [vmem:[#allocation6 + $0x50] sm:$0xff]
      %v203 = vld [vmem:[#allocation6 + $0x58] sm:$0xff]
      %v204 = vld [vmem:[#allocation6 + $0x60] sm:$0xff]
      %v205 = vld [vmem:[#allocation6 + $0x68] sm:$0xff]
      %v206 = vld [vmem:[#allocation6 + $0x70] sm:$0xff]
      %v207 = vld [vmem:[#allocation6 + $0x78] sm:$0xff]
      %v208 = vld [vmem:[%s2] sm:$0x1]
      %v210 = vlaneseq
      %v211 = vshrl.u32 %v210, 7
      %v212 = vsub.s32 0, %v211
      %v213 = vrot.slane %v208, %v212
      %215 = vmatprep.subr.mxu0 0.0
      %216 = vmatpush1.msra.mxu0 %v207
      %217 = vmatprep.subr.mxu0 0.0
      %218 = vmatpush1.msra.mxu0 %v206
      %219 = vmatprep.subr.mxu0 0.0
      %220 = vmatpush1.msra.mxu0 %v205
      %221 = vmatprep.subr.mxu0 0.0
      %222 = vmatpush1.msra.mxu0 %v204
      %223 = vmatprep.subr.mxu0 0.0
      %224 = vmatpush1.msra.mxu0 %v203
      %225 = vmatprep.subr.mxu0 0.0
      %226 = vmatpush1.msra.mxu0 %v202
      %227 = vmatprep.subr.mxu0 0.0
      %228 = vmatpush1.msra.mxu0 %v201
      %229 = vmatprep.subr.mxu0 0.0
      %230 = vmatpush1.msra.mxu0 %v200
      %231 = vmatprep.subr.mxu0 0.0
      %232 = vmatpush1.msra.mxu0 %v199
      %233 = vmatprep.subr.mxu0 0.0
      %234 = vmatpush1.msra.mxu0 %v198
      %235 = vmatprep.subr.mxu0 0.0
      %236 = vmatpush1.msra.mxu0 %v197
      %237 = vmatprep.subr.mxu0 0.0
      %238 = vmatpush1.msra.mxu0 %v196
      %239 = vmatprep.subr.mxu0 0.0
      %240 = vmatpush1.msra.mxu0 %v195
      %241 = vmatprep.subr.mxu0 0.0
      %242 = vmatpush1.msra.mxu0 %v194
      %243 = vmatprep.subr.mxu0 0.0
      %244 = vmatpush1.msra.mxu0 %v193
      %245 = vmatprep.subr.mxu0 0.0
      %246 = vmatpush1.msra.mxu0 %v192
      %247 = vmatprep.subr.mxu0 0.0
      %248 = vmatpush2.msra.mxu0 0.0
      %249 = vmatprep.subr.mxu0 0.0
      %250 = vmatpush2.msra.mxu0 0.0
      %251 = vmatprep.subr.mxu0 0.0
      %252 = vmatpush2.msra.mxu0 0.0
      %253 = vmatprep.subr.mxu0 0.0
      %254 = vmatpush2.msra.mxu0 0.0
      %255 = vmatprep.subr.mxu0 0.0
      %256 = vmatpush2.msra.mxu0 0.0
      %257 = vmatprep.subr.mxu0 0.0
      %258 = vmatpush2.msra.mxu0 0.0
      %259 = vmatprep.subr.mxu0 0.0
      %260 = vmatpush2.msra.mxu0 0.0
      %261 = vmatprep.subr.mxu0 0.0
      %262 = vmatpush2.msra.mxu0 0.0
      %263 = vmatprep.subr.mxu0 0.0
      %264 = vmatpush2.msra.mxu0 0.0
      %265 = vmatprep.subr.mxu0 0.0
      %266 = vmatpush2.msra.mxu0 0.0
      %267 = vmatprep.subr.mxu0 0.0
      %268 = vmatpush2.msra.mxu0 0.0
      %269 = vmatprep.subr.mxu0 0.0
      %270 = vmatpush2.msra.mxu0 0.0
      %271 = vmatprep.subr.mxu0 0.0
      %272 = vmatpush2.msra.mxu0 0.0
      %273 = vmatprep.subr.mxu0 0.0
      %274 = vmatpush2.msra.mxu0 0.0
      %275 = vmatprep.subr.mxu0 0.0
      %276 = vmatpush2.msra.mxu0 0.0
      %277 = vmatprep.subr.mxu0 0.0
      %278 = vmatpush2.msra.mxu0 0.0
      %279 = vmatprep.mubr.f32.mxu0 0.0
      %280 = vmatmul.mubr.f32.gmra.mxu0 %v191
      %v281 = vpop.f32.mrf.mxu0
      %v282 = vadd.f32 %v213, %v281
      %v283 = vpop.f32.mrf.mxu0
      %284 = vdwg.mxu0
      %285 = vst [vmem:[#allocation8] sm:$0xff] %v282
    $region33: #{tpu_custom_call.1} parent=1 // pred_fallthru
      _
    // Predicated region
    $region34: #{tpu_custom_call.1} parent=1 // pred_check
      _
    $region35: #{tpu_custom_call.1} parent=1 // pred_check_branch
      %287 = sbr.rel (0) target = $region37
    $region36: #{tpu_custom_call.1} parent=1 // pred_region
      %s289 = ssub.s32 128, 32
      %290 = vsyncadd [#allocation5], %s289
      %s291 = sshll.u32 [#allocation8], 4
      %s292 = int_to_ptr.vmem [resolvable:$true] %s291
      %297 = dma.vmem_to_hbm [thread:$0]  %s292, 32, %s3, [#allocation5], 32, 32, 2
    $region37: #{tpu_custom_call.1} parent=1 // pred_fallthru
      _
    // Predicated region
    $region38: #{tpu_custom_call.1} parent=1 // pred_check
      _
    $region39: #{tpu_custom_call.1} parent=1 // pred_check_branch
      %299 = sbr.rel (0) target = $region41
    $region40: #{tpu_custom_call.1} parent=1 // pred_region
      %300 = dma.done [#allocation5], 128
    $region41: #{tpu_custom_call.1} parent=1 // pred_fallthru
      _
    %301 = vsyncpa [#allocation4], 1
    %302 = vsyncpa [#allocation7], 1
    %303 = vsyncpa [#allocation5], 1

</llo_original>
